<compile_context>
chip_gen: v5e
topology: v5e:2x2
jax: 0.10.0
libtpu: 0.0.40
codegen_flags: <defaults>
</compile_context>

<pallas_src>
import functools

import jax
import jax.numpy as jnp
from jax.experimental import pallas as pl
from jax.experimental.pallas import tpu as pltpu


_TARGET_TILE_BYTES = 2 * 1024 * 1024  # ~2 MiB per pipeline buffer


def _abs_pos_emb_kernel(emb_ref, o_ref, *, scale):
    # emb_ref / o_ref: (TM, dim) tile of the embedding table / output.
    # Multiply in the table's native dtype (matches PyTorch; bf16-native on
    # v6e/v7x, and identical for f32 tables).
    o_ref[...] = emb_ref[...] * jnp.asarray(scale, dtype=o_ref.dtype)


def _round_up8(n):
    return 8 * pl.cdiv(n, 8)


def absolute_positional_embedding(x, emb_weight):
    """x: (batch, seq, ...) -- only seq = x.shape[1] is used.
    emb_weight: (max_seq_len, dim).
    Returns (seq, dim) = emb_weight[:seq] * dim ** -0.5 (PyTorch semantics)."""
    seq = x.shape[1]
    max_seq_len, dim = emb_weight.shape
    assert seq <= max_seq_len, "sequence longer than positional table"
    scale = float(dim) ** -0.5

    itemsize = jnp.dtype(emb_weight.dtype).itemsize
    row_bytes = dim * itemsize

    # --- Byte-budgeted row tile (multiple of 8 sublanes) -------------------
    tm_budget = (_TARGET_TILE_BYTES // row_bytes) // 8 * 8
    tm = max(8, min(tm_budget, _round_up8(seq)))
    # Balance the final tile: re-derive tm from the tile count so the last
    # grid step isn't mostly masked.
    n_tiles = pl.cdiv(seq, tm)
    tm = _round_up8(pl.cdiv(seq, n_tiles))
    grid = (pl.cdiv(seq, tm),)

    # --- Explicit VMEM budget: 2 input + 2 output double buffers ------------
    pipeline_bytes = 4 * tm * dim * itemsize
    vmem_limit = int(min(max(2 * pipeline_bytes, 16 * 1024 * 1024),
                         48 * 1024 * 1024))

    padded_rows = grid[0] * tm
    cost = pl.CostEstimate(
        flops=padded_rows * dim,                       # one multiply per element
        transcendentals=0,
        bytes_accessed=2 * padded_rows * dim * itemsize,
    )

    # NOTE: if dim is not a multiple of 128 (tiny test dims), stores fall back
    # to masked vst.msk; real model dims (multiples of 128) stay lane-dense.
    return pl.pallas_call(
        functools.partial(_abs_pos_emb_kernel, scale=scale),
        out_shape=jax.ShapeDtypeStruct((seq, dim), emb_weight.dtype),
        grid_spec=pltpu.PrefetchScalarGridSpec(
            num_scalar_prefetch=0,
            grid=grid,
            in_specs=[pl.BlockSpec((tm, dim), lambda i: (i, 0))],
            out_specs=pl.BlockSpec((tm, dim), lambda i: (i, 0)),
        ),
        compiler_params=pltpu.CompilerParams(
            dimension_semantics=("parallel",),   # shards over v7x's 2 TCs
            vmem_limit_bytes=vmem_limit,
        ),
        cost_estimate=cost,
    )(emb_weight)


def _reference(x, emb_weight):
    seq = x.shape[1]
    dim = emb_weight.shape[1]
    return emb_weight[:seq] * (float(dim) ** -0.5)


if __name__ == "__main__":
    batch, seq, dim, max_seq_len = 2, 8, 32, 64

    key = jax.random.PRNGKey(0)
    kx, ke = jax.random.split(key, 2)

    # x is only consulted for its sequence length, matching the PyTorch forward.
    x = jax.random.normal(kx, (batch, seq, dim), dtype=jnp.float32)
    # nn.Embedding default init: N(0, 1).
    emb_weight = jax.random.normal(ke, (max_seq_len, dim), dtype=jnp.float32)

    out = absolute_positional_embedding(x, emb_weight)
    out = jax.block_until_ready(out)

    ref = _reference(x, emb_weight)
    assert out.shape == (seq, dim)
    assert jnp.allclose(out, ref, atol=1e-6, rtol=1e-6), "mismatch vs reference"

    print("KERNEL_OK")
</pallas_src>

<mosaic_0001>
module attributes {stable_mosaic.version = 11 : i64} {
  func.func @_abs_pos_emb_kernel(%arg0: i32, %arg1: memref<8x32xf32, #tpu.memory_space<vmem>>, %arg2: memref<8x32xf32, #tpu.memory_space<vmem>>) attributes {dimension_semantics = [#tpu.dimension_semantics<parallel>], iteration_bounds = array<i64: 1>, scalar_prefetch = 0 : i64, scratch_operands = 0 : i64, tpu.core_type = #tpu.core_type<tc>, window_params = [{transform_indices = @transform_0, window_bounds = array<i64: 8, 32>}, {transform_indices = @transform_1, window_bounds = array<i64: 8, 32>}]} {
    %c0 = arith.constant 0 : index
    %c0_0 = arith.constant 0 : index
    %0 = vector.load %arg1[%c0, %c0_0] : memref<8x32xf32, #tpu.memory_space<vmem>>, vector<8x32xf32>
    %cst = arith.constant 0.176776692 : f32
    %1 = vector.broadcast %cst : f32 to vector<8x32xf32>
    %2 = arith.mulf %0, %1 : vector<8x32xf32>
    %c0_1 = arith.constant 0 : index
    %c0_2 = arith.constant 0 : index
    %3 = vector.load %arg2[%c0_1, %c0_2] : memref<8x32xf32, #tpu.memory_space<vmem>>, vector<8x32xf32>
    tpu.vector_store %arg2[%c0_1, %c0_2], %2 {strides = array<i32>} : memref<8x32xf32, #tpu.memory_space<vmem>>, vector<8x32xf32>,
    return
  }
  func.func @transform_0(%arg0: i32) -> (i32, i32) {
    %c0_i32 = arith.constant 0 : i32
    %c0_i32_0 = arith.constant 0 : i32
    return %arg0, %c0_i32 : i32, i32
  }
  func.func @transform_1(%arg0: i32) -> (i32, i32) {
    %c0_i32 = arith.constant 0 : i32
    %c0_i32_0 = arith.constant 0 : i32
    return %arg0, %c0_i32 : i32, i32
  }
}

</mosaic_0001>

<llo_original>
// kernel: tpu_custom_call.1
$region0: #{tpu_custom_call.1}
  #allocation0 [shape = 'u32[]', space=smem, size = 0x4, offset = 0x4, fixed_abs, tag = 'smem constant byte address 0x4 - core index']
  #allocation1 [shape = 'u32[72,128]{1,0:T(1,128)}', space=vmem, size = 0x9000, scoped, tag = 'internal scratch']
  %s0 = inlined_call_operand.vmem [shape: f32[64,32], index: 0, kind: input, shape index: {}]
  %s1 = inlined_call_operand.hbm [shape: f32[8,32], index: 1, kind: output, shape index: {}]
  %s2 = sld [smem:[#allocation0]]
  $region14: #{tpu_custom_call.1} parent=0
    _
  %s4 = ssub.s32 1, %s2
  %s5 = scalar_select 0, %s4, %s2
  $region1: #{tpu_custom_call.1} parent=0
    #allocation2 [shape = 'u8[4096]{0}', space=vmem, size = 0x1000, scoped, tag = 'output window, operand 0, single buffered']
    #allocation3 [shape = 's32[1]{0}', space=sflag, size = 0x4, scoped, tag = 'scoped memory for tpu_custom_call.1']
    %6 = vsyncpa [#allocation3], 0
    // Predicated region
    $region2: #{tpu_custom_call.1} parent=1 // pred_check
      _
    $region3: #{tpu_custom_call.1} parent=1 // pred_check_branch
      %8 = sbr.rel (0) target = $region5
    $region4: #{tpu_custom_call.1} parent=1 // pred_region
      _
    $region5: #{tpu_custom_call.1} parent=1 // pred_fallthru
      _
    %v9 = vld [vmem:[%s0] sm:$0xff]
    %v10 = vmul.f32 %v9, 0.17677669
    %vm11 = vcmask 261120
    %12 = vst.msk [vmem:[#allocation2] sm:$0xff] %vm11, %v10
    // Predicated region
    $region6: #{tpu_custom_call.1} parent=1 // pred_check
      _
    $region7: #{tpu_custom_call.1} parent=1 // pred_check_branch
      %14 = sbr.rel (0) target = $region9
    $region8: #{tpu_custom_call.1} parent=1 // pred_region
      %16 = vsyncadd [#allocation3], 0
      %s18 = sshll.u32 [#allocation2], 4
      %s19 = int_to_ptr.vmem [resolvable:$true] %s18
      %s20 = sshll.u32 %s1, 4
      %s21 = int_to_ptr.hbm [resolvable:$true] %s20
      %23 = dma.vmem_to_hbm [thread:$0]  %s19, 128, %s21, [#allocation3]
    $region9: #{tpu_custom_call.1} parent=1 // pred_fallthru
      _
    // Predicated region
    $region10: #{tpu_custom_call.1} parent=1 // pred_check
      _
    $region11: #{tpu_custom_call.1} parent=1 // pred_check_branch
      %25 = sbr.rel (0) target = $region13
    $region12: #{tpu_custom_call.1} parent=1 // pred_region
      %27 = dma.done [#allocation3], 128
    $region13: #{tpu_custom_call.1} parent=1 // pred_fallthru
      _
    %28 = vsyncpa [#allocation3], 1

</llo_original>
